<compile_context>
chip_gen: v7x
topology: tpu7x:2x2x1
jax: 0.10.0
libtpu: 0.0.40
codegen_flags: <defaults>
</compile_context>

<pallas_src>
import math

import jax
import jax.numpy as jnp
import numpy as np
from jax import lax
from jax.experimental import pallas as pl
from jax.experimental.pallas import tpu as pltpu

BN_EPS = 1e-5
TOPK = 3  # torch.topk(adjacency_e, 3, dim=1) is hardcoded in the module


def _make_mgcn_kernel(N: int, k: int):
    kf = float(k)

    def kernel(feat_ref, w_ref, b_ref, aifa_ref, out_ref):
        f = feat_ref[0]  # (N, D) float32 — one episode

        rows = lax.broadcasted_iota(jnp.int32, (N, N), 0)
        cols = lax.broadcasted_iota(jnp.int32, (N, N), 1)
        eye = (rows == cols).astype(jnp.float32)

        # ---- pairwise squared distances via the Gram matrix (MXU, f32 acc) ----
        # dist2[i,j] = gram[ii] + gram[jj] - 2*gram[ij]; diagonal is exactly 0.
        gram = lax.dot_general(f, f, (((1,), (1,)), ((), ())),
                               preferred_element_type=jnp.float32)      # (N, N)
        sq_row = jnp.sum(eye * gram, axis=1, keepdims=True)             # (N, 1) ||f_i||^2
        sq_col = jnp.sum(eye * gram, axis=0, keepdims=True)             # (1, N) ||f_j||^2
        dist2 = jnp.maximum(sq_row + sq_col - 2.0 * gram, 0.0)
        e_adj = jnp.exp(dist2 * (-1.0 / 9.0))                           # adjacency_e

        # ---- row-wise top-k threshold (k = 3), multiplicity-aware ----
        # kth = value of the k-th largest entry per row (duplicates counted);
        # sel[i,j] = (e_adj[i,j] >= kth[i]).  Avoids lax.sort / top_k in Mosaic.
        neg = -1.0  # safe sentinel: all e_adj values are in (0, 1]
        m1 = jnp.max(e_adj, axis=1, keepdims=True)
        c1 = jnp.sum((e_adj >= m1).astype(jnp.float32), axis=1, keepdims=True)
        e2 = jnp.where(e_adj >= m1, neg, e_adj)
        m2 = jnp.max(e2, axis=1, keepdims=True)
        c2 = c1 + jnp.sum((e2 >= m2).astype(jnp.float32), axis=1, keepdims=True)
        e3 = jnp.where(e2 >= m2, neg, e2)
        m3 = jnp.max(e3, axis=1, keepdims=True)
        kth = jnp.where(c1 >= kf, m1, jnp.where(c2 >= kf, m2, m3))
        sel = (e_adj >= kth).astype(jnp.float32) * (1.0 - eye)          # zero the diagonal

        # ---- normalized adjacency mix:  aifa0*I + aifa1*An + aifa2*An^2 ----
        adj = eye + sel * e_adj
        inv_d = lax.rsqrt(jnp.sum(adj, axis=1, keepdims=True) + 1.0)    # (N,1) = 1/sqrt(d)
        inv_d_col = jnp.sum(eye * inv_d, axis=0, keepdims=True)         # (1,N) = inv_d.T
        an = adj * inv_d * inv_d_col                                    # inv_D @ A @ inv_D
        an2 = jnp.dot(an, an, preferred_element_type=jnp.float32)

        a0 = aifa_ref[0]     # scalars from SMEM, broadcast over (N,N)
        a1 = aifa_ref[1]
        a2 = aifa_ref[2]
        a_final = a0 * eye + a1 * an + a2 * an2

        # ---- GraphConvolution + folded BatchNorm(eval) + ReLU ----
        # BN scale/shift and the GCN bias are folded into w_ref / b_ref host-side.
        support = jnp.dot(f.astype(jnp.bfloat16), w_ref[...],
                          preferred_element_type=jnp.float32)            # (N, Hp)
        gcn = jnp.dot(a_final.astype(jnp.bfloat16),
                      support.astype(jnp.bfloat16),
                      preferred_element_type=jnp.float32)                # (N, Hp)
        out_ref[0] = jnp.maximum(gcn + b_ref[...], 0.0)

    return kernel


def mgcn_forward(features, gcn_w, gcn_b, bn_gamma, bn_beta, bn_rm, bn_rv,
                 aifa_params):
    """Batched MultiGCN forward (eval mode).

    features: (B, N, D) batch of episodes, or a single (N, D) episode.
    aifa_params: raw (3,) [aifa1, aifa2, aifa3]; softmax applied here (host-side).
    Returns (B, N, H) / (N, H) float32.
    """
    squeeze = features.ndim == 2
    if squeeze:
        features = features[None]
    features = features.astype(jnp.float32)
    B, N, D = features.shape
    H = gcn_w.shape[1]
    Hp = ((H + 127) // 128) * 128          # lane-dense output: pad H to mult. of 128

    # Fold eval-mode BatchNorm + GCN bias into the weights (one-off, host-side):
    #   gamma*(A(XW)+b - rm)*rsqrt(rv+eps) + beta  ==  A(X W') + b'
    s = (bn_gamma * jax.lax.rsqrt(bn_rv + BN_EPS)).astype(jnp.float32)
    w_f = (gcn_w.astype(jnp.float32) * s[None, :]).astype(jnp.bfloat16)  # bf16 MXU operand
    b_f = ((gcn_b - bn_rm) * s + bn_beta).astype(jnp.float32)

    w_pad = jnp.zeros((D, Hp), jnp.bfloat16).at[:, :H].set(w_f)
    b_pad = jnp.zeros((1, Hp), jnp.float32).at[:, :H].set(b_f[None, :])

    aifa = jax.nn.softmax(aifa_params.astype(jnp.float32)).reshape(3)

    kernel = _make_mgcn_kernel(N, TOPK)
    out = pl.pallas_call(
        kernel,
        out_shape=jax.ShapeDtypeStruct((B, N, Hp), jnp.float32),
        grid=(B,),
        in_specs=[
            pl.BlockSpec((1, N, D), lambda b: (b, 0, 0)),   # per-episode features
            pl.BlockSpec((D, Hp), lambda b: (0, 0)),        # folded weight (resident)
            pl.BlockSpec((1, Hp), lambda b: (0, 0)),        # folded bias   (resident)
            pl.BlockSpec(memory_space=pltpu.MemorySpace.SMEM),  # softmaxed aifa scalars
        ],
        out_specs=pl.BlockSpec((1, N, Hp), lambda b: (b, 0, 0)),
        compiler_params=pltpu.CompilerParams(
            dimension_semantics=("parallel",),              # episodes across TCs (v7x)
            vmem_limit_bytes=32 * 1024 * 1024,
        ),
    )(features, w_pad, b_pad, aifa)

    out = out[..., :H]
    return out[0] if squeeze else out


# ----------------------------- references --------------------------------- #
def _adjacency_reference(features, aifa):
    """Pure-JAX mirror of MultiAdjacencyCompute (exact pairwise diffs, lax.top_k)."""
    N = features.shape[0]
    diff = features[:, None, :] - features[None, :, :]
    dist2 = jnp.sum(diff * diff, axis=-1)
    e = jnp.exp(-dist2 / 9.0)
    _, pos = jax.lax.top_k(e, TOPK)
    adj0 = jnp.sum(jax.nn.one_hot(pos, N, dtype=jnp.float32), axis=1)
    adj0 = adj0 * (1.0 - jnp.eye(N, dtype=jnp.float32))
    adj = jnp.eye(N, dtype=jnp.float32) + adj0 * e
    d = jnp.sqrt(jnp.sum(adj, axis=1) + 1.0)
    an = adj / d[:, None] / d[None, :]
    return aifa[0] * jnp.eye(N) + aifa[1] * an + aifa[2] * (an @ an)


def mgcn_reference_f32(features, w, b, gamma, beta, rm, rv, aifa):
    """Torch-faithful eval-mode forward, all float32."""
    a_final = _adjacency_reference(features, aifa)
    out = a_final @ (features @ w) + b
    y = (out - rm) * jax.lax.rsqrt(rv + BN_EPS) * gamma + beta
    return jnp.maximum(y, 0.0)


def mgcn_reference_bf16(features, w, b, gamma, beta, rm, rv, aifa):
    """Mirrors the kernel's precision choices (BN fold + bf16 MXU inputs, f32 accum)."""
    a_final = _adjacency_reference(features, aifa)
    s = gamma * jax.lax.rsqrt(rv + BN_EPS)
    w_f = (w * s[None, :]).astype(jnp.bfloat16)
    b_f = (b - rm) * s + beta
    support = jnp.dot(features.astype(jnp.bfloat16), w_f,
                      preferred_element_type=jnp.float32)
    out = jnp.dot(a_final.astype(jnp.bfloat16), support.astype(jnp.bfloat16),
                  preferred_element_type=jnp.float32) + b_f
    return jnp.maximum(out, 0.0)


if __name__ == "__main__":
    # Episodes, nodes, input feature dim, GCN output dim (=32, fixed by the module).
    B, N, D, H = 4, 16, 64, 32

    key = jax.random.PRNGKey(0)
    k_feat, k_w, k_b, k_g, k_be, k_rm, k_rv = jax.random.split(key, 7)

    features = 0.3 * jax.random.normal(k_feat, (B, N, D), dtype=jnp.float32)

    # GraphConvolution.weight: kaiming_uniform on a (input_dim, 32) tensor
    # (torch's fan_in for a 2-D (in, out) tensor is size(1) = 32).
    bound = math.sqrt(2.0) * math.sqrt(3.0 / H)
    gcn_w = jax.random.uniform(k_w, (D, H), jnp.float32, -bound, bound)
    gcn_b = 0.02 * jax.random.normal(k_b, (H,), dtype=jnp.float32)

    # Non-trivial eval-mode BatchNorm1d(32) parameters (exercise the host-side fold).
    bn_gamma = 1.0 + 0.1 * jax.random.normal(k_g, (H,), dtype=jnp.float32)
    bn_beta = 0.05 * jax.random.normal(k_be, (H,), dtype=jnp.float32)
    bn_rm = 0.1 * jax.random.normal(k_rm, (H,), dtype=jnp.float32)
    bn_rv = jax.random.uniform(k_rv, (H,), jnp.float32, 0.5, 1.5)

    # aifa1 is frozen at 0 in the module; aifa2 / aifa3 are learnable scalars.
    aifa_params = jnp.array([0.0, 0.3, -0.2], jnp.float32)

    out = mgcn_forward(features, gcn_w, gcn_b, bn_gamma, bn_beta, bn_rm, bn_rv,
                       aifa_params)
    out = jax.block_until_ready(out)
    assert out.shape == (B, N, H)

    aifa = jax.nn.softmax(aifa_params)
    for ep in range(B):
        ref_bf = mgcn_reference_bf16(features[ep], gcn_w, gcn_b, bn_gamma,
                                     bn_beta, bn_rm, bn_rv, aifa)
        ref_32 = mgcn_reference_f32(features[ep], gcn_w, gcn_b, bn_gamma,
                                    bn_beta, bn_rm, bn_rv, aifa)
        # Tight check vs. a precision-matched reference (catches structural bugs).
        np.testing.assert_allclose(np.asarray(out[ep]), np.asarray(ref_bf),
                                   rtol=1e-2, atol=1e-2)
        # Looser check vs. the full-f32 torch-faithful reference (bf16 MXU inputs).
        np.testing.assert_allclose(np.asarray(out[ep]), np.asarray(ref_32),
                                   rtol=5e-2, atol=5e-2)
    print("KERNEL_OK")
</pallas_src>

<mosaic_0001>
module attributes {stable_mosaic.version = 11 : i64} {
  func.func @kernel(%arg0: i32, %arg1: memref<1x16x64xf32, #tpu.memory_space<vmem>>, %arg2: memref<64x128xbf16, #tpu.memory_space<vmem>>, %arg3: memref<1x128xf32, #tpu.memory_space<vmem>>, %arg4: memref<3xf32, #tpu.memory_space<smem>>, %arg5: memref<1x16x128xf32, #tpu.memory_space<vmem>>) attributes {dimension_semantics = [#tpu.dimension_semantics<parallel>], iteration_bounds = array<i64: 4>, scalar_prefetch = 0 : i64, scratch_operands = 0 : i64, tpu.core_type = #tpu.core_type<tc>, window_params = [{transform_indices = @transform_0, window_bounds = array<i64: 1, 16, 64>}, {pipeline_mode = #tpu.pipeline_mode<synchronous>, transform_indices = @transform_1, window_bounds = array<i64: 64, 128>}, {pipeline_mode = #tpu.pipeline_mode<synchronous>, transform_indices = @transform_2, window_bounds = array<i64: 1, 128>}, {transform_indices = @transform_3, window_bounds = array<i64: 3>}, {transform_indices = @transform_4, window_bounds = array<i64: 1, 16, 128>}]} {
    %c0 = arith.constant 0 : index
    %c0_0 = arith.constant 0 : index
    %c0_1 = arith.constant 0 : index
    %0 = vector.load %arg1[%c0, %c0_0, %c0_1] : memref<1x16x64xf32, #tpu.memory_space<vmem>>, vector<1x16x64xf32>
    %1 = vector.shape_cast %0 : vector<1x16x64xf32> to vector<16x64xf32>
    %2 = tpu.iota {dimensions = array<i32: 0>} : vector<16x16xi32>
    %3 = tpu.iota {dimensions = array<i32: 1>} : vector<16x16xi32>
    %4 = arith.cmpi eq, %2, %3 : vector<16x16xi32>
    %5 = arith.extui %4 : vector<16x16xi1> to vector<16x16xi32>
    %6 = arith.sitofp %5 : vector<16x16xi32> to vector<16x16xf32>
    %cst = arith.constant dense<0.000000e+00> : vector<16x16xf32>
    %7 = tpu.matmul %1, %1, %cst {dimension_numbers = #tpu.dot_dimension_numbers<[1], [1], [0], [0], [0, 0, 1, 0], [], []>} : vector<16x64xf32>, vector<16x64xf32>, vector<16x16xf32> -> vector<16x16xf32>
    %8 = arith.mulf %6, %7 : vector<16x16xf32>
    %cst_2 = arith.constant dense<0.000000e+00> : vector<16xf32>
    %9 = vector.multi_reduction <add>, %8, %cst_2 [1] : vector<16x16xf32> to vector<16xf32>
    %10 = vector.shape_cast %9 : vector<16xf32> to vector<16x1xf32>
    %11 = arith.mulf %6, %7 : vector<16x16xf32>
    %cst_3 = arith.constant dense<0.000000e+00> : vector<16xf32>
    %12 = vector.multi_reduction <add>, %11, %cst_3 [0] : vector<16x16xf32> to vector<16xf32>
    %13 = vector.shape_cast %12 : vector<16xf32> to vector<1x16xf32>
    %14 = vector.broadcast %10 : vector<16x1xf32> to vector<16x16xf32>
    %15 = vector.broadcast %13 : vector<1x16xf32> to vector<16x16xf32>
    %16 = arith.addf %14, %15 : vector<16x16xf32>
    %cst_4 = arith.constant 2.000000e+00 : f32
    %17 = vector.broadcast %cst_4 : f32 to vector<16x16xf32>
    %18 = arith.mulf %17, %7 : vector<16x16xf32>
    %19 = arith.subf %16, %18 : vector<16x16xf32>
    %cst_5 = arith.constant 0.000000e+00 : f32
    %20 = vector.broadcast %cst_5 : f32 to vector<16x16xf32>
    %21 = arith.maximumf %19, %20 : vector<16x16xf32>
    %cst_6 = arith.constant -0.111111112 : f32
    %22 = vector.broadcast %cst_6 : f32 to vector<16x16xf32>
    %23 = arith.mulf %21, %22 : vector<16x16xf32>
    %24 = math.exp %23 : vector<16x16xf32>
    %cst_7 = arith.constant dense<0xFF800000> : vector<16xf32>
    %25 = vector.multi_reduction <maximumf>, %24, %cst_7 [1] : vector<16x16xf32> to vector<16xf32>
    %26 = vector.shape_cast %25 : vector<16xf32> to vector<16x1xf32>
    %27 = vector.broadcast %26 : vector<16x1xf32> to vector<16x16xf32>
    %28 = arith.cmpf oge, %24, %27 : vector<16x16xf32>
    %29 = arith.extui %28 : vector<16x16xi1> to vector<16x16xi32>
    %30 = arith.sitofp %29 : vector<16x16xi32> to vector<16x16xf32>
    %cst_8 = arith.constant dense<0.000000e+00> : vector<16xf32>
    %31 = vector.multi_reduction <add>, %30, %cst_8 [1] : vector<16x16xf32> to vector<16xf32>
    %32 = vector.shape_cast %31 : vector<16xf32> to vector<16x1xf32>
    %33 = vector.broadcast %26 : vector<16x1xf32> to vector<16x16xf32>
    %34 = arith.cmpf oge, %24, %33 : vector<16x16xf32>
    %cst_9 = arith.constant -1.000000e+00 : f32
    %35 = vector.broadcast %cst_9 : f32 to vector<16x16xf32>
    %36 = arith.select %34, %35, %24 : vector<16x16xi1>, vector<16x16xf32>
    %cst_10 = arith.constant dense<0xFF800000> : vector<16xf32>
    %37 = vector.multi_reduction <maximumf>, %36, %cst_10 [1] : vector<16x16xf32> to vector<16xf32>
    %38 = vector.shape_cast %37 : vector<16xf32> to vector<16x1xf32>
    %39 = vector.broadcast %38 : vector<16x1xf32> to vector<16x16xf32>
    %40 = arith.cmpf oge, %36, %39 : vector<16x16xf32>
    %41 = arith.extui %40 : vector<16x16xi1> to vector<16x16xi32>
    %42 = arith.sitofp %41 : vector<16x16xi32> to vector<16x16xf32>
    %cst_11 = arith.constant dense<0.000000e+00> : vector<16xf32>
    %43 = vector.multi_reduction <add>, %42, %cst_11 [1] : vector<16x16xf32> to vector<16xf32>
    %44 = vector.shape_cast %43 : vector<16xf32> to vector<16x1xf32>
    %45 = arith.addf %32, %44 : vector<16x1xf32>
    %46 = vector.broadcast %38 : vector<16x1xf32> to vector<16x16xf32>
    %47 = arith.cmpf oge, %36, %46 : vector<16x16xf32>
    %cst_12 = arith.constant -1.000000e+00 : f32
    %48 = vector.broadcast %cst_12 : f32 to vector<16x16xf32>
    %49 = arith.select %47, %48, %36 : vector<16x16xi1>, vector<16x16xf32>
    %cst_13 = arith.constant dense<0xFF800000> : vector<16xf32>
    %50 = vector.multi_reduction <maximumf>, %49, %cst_13 [1] : vector<16x16xf32> to vector<16xf32>
    %51 = vector.shape_cast %50 : vector<16xf32> to vector<16x1xf32>
    %cst_14 = arith.constant 3.000000e+00 : f32
    %52 = vector.broadcast %cst_14 : f32 to vector<16x1xf32>
    %53 = arith.cmpf oge, %32, %52 : vector<16x1xf32>
    %cst_15 = arith.constant 3.000000e+00 : f32
    %54 = vector.broadcast %cst_15 : f32 to vector<16x1xf32>
    %55 = arith.cmpf oge, %45, %54 : vector<16x1xf32>
    %56 = arith.select %55, %38, %51 : vector<16x1xi1>, vector<16x1xf32>
    %57 = arith.select %53, %26, %56 : vector<16x1xi1>, vector<16x1xf32>
    %58 = vector.broadcast %57 : vector<16x1xf32> to vector<16x16xf32>
    %59 = arith.cmpf oge, %24, %58 : vector<16x16xf32>
    %60 = arith.extui %59 : vector<16x16xi1> to vector<16x16xi32>
    %61 = arith.sitofp %60 : vector<16x16xi32> to vector<16x16xf32>
    %cst_16 = arith.constant 1.000000e+00 : f32
    %62 = vector.broadcast %cst_16 : f32 to vector<16x16xf32>
    %63 = arith.subf %62, %6 : vector<16x16xf32>
    %64 = arith.mulf %61, %63 : vector<16x16xf32>
    %65 = arith.mulf %64, %24 : vector<16x16xf32>
    %66 = arith.addf %6, %65 : vector<16x16xf32>
    %cst_17 = arith.constant dense<0.000000e+00> : vector<16xf32>
    %67 = vector.multi_reduction <add>, %66, %cst_17 [1] : vector<16x16xf32> to vector<16xf32>
    %68 = vector.shape_cast %67 : vector<16xf32> to vector<16x1xf32>
    %cst_18 = arith.constant 1.000000e+00 : f32
    %69 = vector.broadcast %cst_18 : f32 to vector<16x1xf32>
    %70 = arith.addf %68, %69 : vector<16x1xf32>
    %71 = math.rsqrt %70 : vector<16x1xf32>
    %72 = vector.broadcast %71 : vector<16x1xf32> to vector<16x16xf32>
    %73 = arith.mulf %6, %72 : vector<16x16xf32>
    %cst_19 = arith.constant dense<0.000000e+00> : vector<16xf32>
    %74 = vector.multi_reduction <add>, %73, %cst_19 [0] : vector<16x16xf32> to vector<16xf32>
    %75 = vector.shape_cast %74 : vector<16xf32> to vector<1x16xf32>
    %76 = vector.broadcast %71 : vector<16x1xf32> to vector<16x16xf32>
    %77 = arith.mulf %66, %76 : vector<16x16xf32>
    %78 = vector.broadcast %75 : vector<1x16xf32> to vector<16x16xf32>
    %79 = arith.mulf %77, %78 : vector<16x16xf32>
    %cst_20 = arith.constant dense<0.000000e+00> : vector<16x16xf32>
    %80 = tpu.matmul %79, %79, %cst_20 {dimension_numbers = #tpu.dot_dimension_numbers<[1], [0], [0], [1], [0, 0, 1, 1], [], []>} : vector<16x16xf32>, vector<16x16xf32>, vector<16x16xf32> -> vector<16x16xf32>
    %c0_21 = arith.constant 0 : index
    %81 = memref.load %arg4[%c0_21] : memref<3xf32, #tpu.memory_space<smem>>
    %c1 = arith.constant 1 : index
    %82 = memref.load %arg4[%c1] : memref<3xf32, #tpu.memory_space<smem>>
    %c2 = arith.constant 2 : index
    %83 = memref.load %arg4[%c2] : memref<3xf32, #tpu.memory_space<smem>>
    %84 = vector.broadcast %81 : f32 to vector<16x16xf32>
    %85 = arith.mulf %84, %6 : vector<16x16xf32>
    %86 = vector.broadcast %82 : f32 to vector<16x16xf32>
    %87 = arith.mulf %86, %79 : vector<16x16xf32>
    %88 = arith.addf %85, %87 : vector<16x16xf32>
    %89 = vector.broadcast %83 : f32 to vector<16x16xf32>
    %90 = arith.mulf %89, %80 : vector<16x16xf32>
    %91 = arith.addf %88, %90 : vector<16x16xf32>
    %92 = arith.truncf %1 : vector<16x64xf32> to vector<16x64xbf16>
    %c0_22 = arith.constant 0 : index
    %c0_23 = arith.constant 0 : index
    %93 = vector.load %arg2[%c0_22, %c0_23] : memref<64x128xbf16, #tpu.memory_space<vmem>>, vector<64x128xbf16>
    %cst_24 = arith.constant dense<0.000000e+00> : vector<16x128xf32>
    %94 = tpu.matmul %92, %93, %cst_24 {dimension_numbers = #tpu.dot_dimension_numbers<[1], [0], [0], [1], [0, 0, 1, 1], [], []>} : vector<16x64xbf16>, vector<64x128xbf16>, vector<16x128xf32> -> vector<16x128xf32>
    %95 = arith.truncf %91 : vector<16x16xf32> to vector<16x16xbf16>
    %96 = arith.truncf %94 : vector<16x128xf32> to vector<16x128xbf16>
    %cst_25 = arith.constant dense<0.000000e+00> : vector<16x128xf32>
    %97 = tpu.matmul %95, %96, %cst_25 {dimension_numbers = #tpu.dot_dimension_numbers<[1], [0], [0], [1], [0, 0, 1, 1], [], []>} : vector<16x16xbf16>, vector<16x128xbf16>, vector<16x128xf32> -> vector<16x128xf32>
    %c0_26 = arith.constant 0 : index
    %c0_27 = arith.constant 0 : index
    %98 = vector.load %arg3[%c0_26, %c0_27] : memref<1x128xf32, #tpu.memory_space<vmem>>, vector<1x128xf32>
    %99 = vector.broadcast %98 : vector<1x128xf32> to vector<16x128xf32>
    %100 = arith.addf %97, %99 : vector<16x128xf32>
    %cst_28 = arith.constant 0.000000e+00 : f32
    %101 = vector.broadcast %cst_28 : f32 to vector<16x128xf32>
    %102 = arith.maximumf %100, %101 : vector<16x128xf32>
    %c0_29 = arith.constant 0 : index
    %c0_30 = arith.constant 0 : index
    %c0_31 = arith.constant 0 : index
    %103 = vector.load %arg5[%c0_29, %c0_30, %c0_31] : memref<1x16x128xf32, #tpu.memory_space<vmem>>, vector<1x16x128xf32>
    %104 = vector.shape_cast %103 : vector<1x16x128xf32> to vector<16x128xf32>
    %105 = vector.shape_cast %102 : vector<16x128xf32> to vector<1x16x128xf32>
    tpu.vector_store %arg5[%c0_29, %c0_30, %c0_31], %105 {strides = array<i32>} : memref<1x16x128xf32, #tpu.memory_space<vmem>>, vector<1x16x128xf32>,
    return
  }
  func.func @transform_0(%arg0: i32) -> (i32, i32, i32) {
    %c0_i32 = arith.constant 0 : i32
    %c0_i32_0 = arith.constant 0 : i32
    %c0_i32_1 = arith.constant 0 : i32
    return %arg0, %c0_i32, %c0_i32_0 : i32, i32, i32
  }
  func.func @transform_1(%arg0: i32) -> (i32, i32) {
    %c0_i32 = arith.constant 0 : i32
    %c0_i32_0 = arith.constant 0 : i32
    %c0_i32_1 = arith.constant 0 : i32
    return %c0_i32, %c0_i32_0 : i32, i32
  }
  func.func @transform_2(%arg0: i32) -> (i32, i32) {
    %c0_i32 = arith.constant 0 : i32
    %c0_i32_0 = arith.constant 0 : i32
    %c0_i32_1 = arith.constant 0 : i32
    return %c0_i32, %c0_i32_0 : i32, i32
  }
  func.func @transform_3(%arg0: i32) -> i32 {
    %c0_i32 = arith.constant 0 : i32
    %c0_i32_0 = arith.constant 0 : i32
    return %c0_i32 : i32
  }
  func.func @transform_4(%arg0: i32) -> (i32, i32, i32) {
    %c0_i32 = arith.constant 0 : i32
    %c0_i32_0 = arith.constant 0 : i32
    %c0_i32_1 = arith.constant 0 : i32
    return %arg0, %c0_i32, %c0_i32_0 : i32, i32, i32
  }
}

</mosaic_0001>

<llo_original>
// kernel: tpu_custom_call.1
$region0: #{tpu_custom_call.1}
  #allocation0 [shape = 'u32[]', space=smem, size = 0x4, offset = 0x4, fixed_abs, tag = 'smem constant byte address 0x4 - core index']
  #allocation1 [shape = 'u32[144,128]{1,0:T(1,128)}', space=vmem, size = 0x12000, scoped, tag = 'internal scratch']
  %s0 = inlined_call_operand.hbm [shape: f32[4,16,64], index: 0, kind: input, shape index: {}]
  %s1 = inlined_call_operand.hbm [shape: bf16[64,128], index: 1, kind: input, shape index: {}]
  %s2 = inlined_call_operand.vmem [shape: f32[1,128], index: 2, kind: input, shape index: {}]
  %s3 = inlined_call_operand.vmem [shape: f32[3], index: 3, kind: input, shape index: {}]
  %s4 = inlined_call_operand.hbm [shape: f32[4,16,128], index: 4, kind: output, shape index: {}]
  %s5 = sld [smem:[#allocation0]]
  $region61: #{tpu_custom_call.1} parent=0
    _
  %s7 = ssub.s32 1, %s5
  %s8 = scalar_select 0, %s7, %s5
  $region1: #{tpu_custom_call.1} parent=0
    #allocation2 [shape = 'u8[16384]{0}', space=vmem, size = 0x4000, scoped, tag = 'input window, operand 0']
    #allocation3 [shape = 's32[2]{0}', space=sflag, size = 0x8, scoped, tag = 'scoped memory for tpu_custom_call.1']
    #allocation4 [shape = 's32[2]{0}', space=sflag, size = 0x8, scoped, tag = 'scoped memory for tpu_custom_call.1']
    #allocation5 [shape = 's32[2]{0}', space=sflag, size = 0x8, scoped, tag = 'scoped memory for tpu_custom_call.1']
    #allocation6 [shape = 'u8[16384]{0}', space=vmem, size = 0x4000, scoped, tag = 'input window, operand 1, single buffered']
    #allocation7 [shape = 's32[1]{0}', space=sflag, size = 0x4, scoped, tag = 'scoped memory for tpu_custom_call.1']
    #allocation8 [shape = 'u8[512]{0}', space=smem, size = 0x200, scoped, tag = 'input window, operand 3, single buffered']
    #allocation9 [shape = 'u8[16384]{0}', space=vmem, size = 0x4000, scoped, tag = 'output window, operand 0']
    %9 = vsyncpa [#allocation3], 0
    %s10 = scalar_lea.sflag [#allocation3], 1
    %11 = vsyncpa %s10, 0
    %12 = vsyncpa [#allocation7], 0
    %13 = vsyncpa [#allocation5], 0
    %14 = vsyncpa [#allocation4], 0
    %s15 = scalar_lea.sflag [#allocation4], 1
    %16 = vsyncpa %s15, 0
    loop: start=0, step=1, limit=6
    $region2: #{tpu_custom_call.1} parent=1 // loop_pre_header
      _
    $region3: #{tpu_custom_call.1} parent=1 // loop_header
      %s18 = sphi 0, %s22
      %p19 = scmp.ge.s32.totalorder %s18, 6
      %s28 = sphi 0, %s30
      %s31 = sphi 0, %s28
      %s32 = sphi 0, %s31
      %s48 = sphi 0, %s32
      %s52 = sphi 0, %s52
      %s54 = sphi 0, %s52
      %s55 = sphi 0, %s54
      %s69 = sphi 0, %s55
      %s73 = sphi 0, %s73
      %s75 = sphi 0, %s73
      %s76 = sphi 0, %s75
      %s90 = sphi 0, %s76
      %s94 = sphi 0, %s94
      %s96 = sphi 0, %s94
      %s97 = sphi 0, %s96
      %s111 = sphi 0, %s97
      %s117 = sphi 0, %s119
      %s120 = sphi 0, %s117
      %s121 = sphi 0, %s120
      %s137 = sphi 0, %s121
    $region4: #{tpu_custom_call.1} parent=1 // loop_header_branch
      %21 = sbr.rel (%p19) target = $region8
    $region5: #{tpu_custom_call.1} parent=1 // loop_body
      %s23 = ssub.s32 %s18, 1
      %s24 = ssub.s32 %s18, 2
      %s25 = sadd.s32 %s18, 1
      %s26 = ssub.s32 %s18, %s25
      %p27 = scmp.eq.s32.totalorder %s26, 0
      %s29 = sadd.s32 %s28, 1
      %s30 = scalar_select %p27, %s28, %s29
      %p33 = pneg %p27
      %p34 = scmp.eq.s32.totalorder %s18, 3
      %p35 = por %p33, %p34
      %p36 = scmp.ne.s32.totalorder %s28, %s31
      %p37 = scmp.eq.s32.totalorder %s18, 0
      %p38 = por %p36, %p37
      %p39 = scmp.ne.s32.totalorder %s28, %s31
      %p40 = scmp.eq.s32.totalorder %s23, 3
      %p41 = por %p39, %p40
      %p42 = scmp.ne.s32.totalorder %s31, %s32
      %p43 = scmp.eq.s32.totalorder %s23, 0
      %p44 = por %p42, %p43
      %p45 = scmp.ne.s32.totalorder %s31, %s32
      %p46 = scmp.eq.s32.totalorder %s24, 3
      %p47 = por %p45, %p46
      %p49 = scmp.ne.s32.totalorder %s32, %s48
      %p50 = scmp.eq.s32.totalorder %s24, 0
      %p51 = por %p49, %p50
      %s53 = sadd.s32 %s52, 1
      %p56 = scmp.eq.s32.totalorder %s18, 3
      %p57 = scmp.ne.s32.totalorder %s52, %s54
      %p58 = scmp.eq.s32.totalorder %s18, 0
      %p59 = por %p57, %p58
      %p60 = scmp.ne.s32.totalorder %s52, %s54
      %p61 = scmp.eq.s32.totalorder %s23, 3
      %p62 = por %p60, %p61
      %p63 = scmp.ne.s32.totalorder %s54, %s55
      %p64 = scmp.eq.s32.totalorder %s23, 0
      %p65 = por %p63, %p64
      %p66 = scmp.ne.s32.totalorder %s54, %s55
      %p67 = scmp.eq.s32.totalorder %s24, 3
      %p68 = por %p66, %p67
      %p70 = scmp.ne.s32.totalorder %s55, %s69
      %p71 = scmp.eq.s32.totalorder %s24, 0
      %p72 = por %p70, %p71
      %s74 = sadd.s32 %s73, 1
      %p77 = scmp.eq.s32.totalorder %s18, 3
      %p78 = scmp.ne.s32.totalorder %s73, %s75
      %p79 = scmp.eq.s32.totalorder %s18, 0
      %p80 = por %p78, %p79
      %p81 = scmp.ne.s32.totalorder %s73, %s75
      %p82 = scmp.eq.s32.totalorder %s23, 3
      %p83 = por %p81, %p82
      %p84 = scmp.ne.s32.totalorder %s75, %s76
      %p85 = scmp.eq.s32.totalorder %s23, 0
      %p86 = por %p84, %p85
      %p87 = scmp.ne.s32.totalorder %s75, %s76
      %p88 = scmp.eq.s32.totalorder %s24, 3
      %p89 = por %p87, %p88
      %p91 = scmp.ne.s32.totalorder %s76, %s90
      %p92 = scmp.eq.s32.totalorder %s24, 0
      %p93 = por %p91, %p92
      %s95 = sadd.s32 %s94, 1
      %p98 = scmp.eq.s32.totalorder %s18, 3
      %p99 = scmp.ne.s32.totalorder %s94, %s96
      %p100 = scmp.eq.s32.totalorder %s18, 0
      %p101 = por %p99, %p100
      %p102 = scmp.ne.s32.totalorder %s94, %s96
      %p103 = scmp.eq.s32.totalorder %s23, 3
      %p104 = por %p102, %p103
      %p105 = scmp.ne.s32.totalorder %s96, %s97
      %p106 = scmp.eq.s32.totalorder %s23, 0
      %p107 = por %p105, %p106
      %p108 = scmp.ne.s32.totalorder %s96, %s97
      %p109 = scmp.eq.s32.totalorder %s24, 3
      %p110 = por %p108, %p109
      %p112 = scmp.ne.s32.totalorder %s97, %s111
      %p113 = scmp.eq.s32.totalorder %s24, 0
      %p114 = por %p112, %p113
      %s115 = ssub.s32 %s18, %s25
      %p116 = scmp.eq.s32.totalorder %s115, 0
      %s118 = sadd.s32 %s117, 1
      %s119 = scalar_select %p116, %s117, %s118
      %p122 = pneg %p116
      %p123 = scmp.eq.s32.totalorder %s18, 3
      %p124 = por %p122, %p123
      %p125 = scmp.ne.s32.totalorder %s117, %s120
      %p126 = scmp.eq.s32.totalorder %s18, 0
      %p127 = por %p125, %p126
      %p128 = scmp.ne.s32.totalorder %s117, %s120
      %p129 = scmp.eq.s32.totalorder %s23, 3
      %p130 = por %p128, %p129
      %p131 = scmp.ne.s32.totalorder %s120, %s121
      %p132 = scmp.eq.s32.totalorder %s23, 0
      %p133 = por %p131, %p132
      %p134 = scmp.ne.s32.totalorder %s120, %s121
      %p135 = scmp.eq.s32.totalorder %s24, 3
      %p136 = por %p134, %p135
      %p138 = scmp.ne.s32.totalorder %s121, %s137
      %p139 = scmp.eq.s32.totalorder %s24, 0
      %p140 = por %p138, %p139
      %p141 = scmp.le.s32.totalorder 1, %s18
      %p142 = scmp.lt.s32.totalorder %s18, 5
      %p143 = pnand %p141, %p142
      %p144 = pneg %p143
      // Predicated region
      $region9: #{tpu_custom_call.1} parent=5 // pred_check
        _
      $region10: #{tpu_custom_call.1} parent=5 // pred_check_branch
        %146 = sbr.rel (%p143) target = $region12
      $region11: #{tpu_custom_call.1} parent=5 // pred_region
        %s147 = ssub.s32 %s18, 1
        // Predicated region
        $region13: #{tpu_custom_call.1} parent=11 // pred_check
          %p148 = pneg %p65
        $region14: #{tpu_custom_call.1} parent=11 // pred_check_branch
          %150 = sbr.rel (%p148) target = $region16
        $region15: #{tpu_custom_call.1} parent=11 // pred_region
          %s152 = ssub.s32 512, 512
          %153 = vsyncadd [#allocation7], %s152
          %s154 = sshll.u32 [#allocation6], 4
          %s155 = int_to_ptr.vmem [resolvable:$true] %s154
          %160 = dma.hbm_to_vmem [thread:$0]  %s1, 512, %s155, [#allocation7], 64, 64, 4
        $region16: #{tpu_custom_call.1} parent=11 // pred_fallthru
          _
        // Predicated region
        $region17: #{tpu_custom_call.1} parent=11 // pred_check
          %p161 = pneg %p86
        $region18: #{tpu_custom_call.1} parent=11 // pred_check_branch
          %163 = sbr.rel (%p161) target = $region20
        $region19: #{tpu_custom_call.1} parent=11 // pred_region
          _
        $region20: #{tpu_custom_call.1} parent=11 // pred_fallthru
          _
        // Predicated region
        $region21: #{tpu_custom_call.1} parent=11 // pred_check
          %p164 = pneg %p107
        $region22: #{tpu_custom_call.1} parent=11 // pred_check_branch
          %166 = sbr.rel (%p164) target = $region24
        $region23: #{tpu_custom_call.1} parent=11 // pred_region
          %s168 = ssub.s32 16, 16
          %169 = vsyncadd [#allocation5], %s168
          %s171 = sshll.u32 %s3, 4
          %s172 = int_to_ptr.vmem [resolvable:$true] %s171
          %174 = dma.vmem_to_smem %s172, 16, [#allocation8], [#allocation5]
        $region24: #{tpu_custom_call.1} parent=11 // pred_fallthru
          _
      $region12: #{tpu_custom_call.1} parent=5 // pred_fallthru
        _
      %p175 = scmp.lt.s32.totalorder %s18, 4
      // Predicated region
      $region25: #{tpu_custom_call.1} parent=5 // pred_check
        %p176 = pneg %p175
      $region26: #{tpu_custom_call.1} parent=5 // pred_check_branch
        %178 = sbr.rel (%p176) target = $region28
      $region27: #{tpu_custom_call.1} parent=5 // pred_region
        // Predicated region
        $region29: #{tpu_custom_call.1} parent=27 // pred_check
          %p179 = pneg %p38
        $region30: #{tpu_custom_call.1} parent=27 // pred_check_branch
          %181 = sbr.rel (%p179) target = $region32
        $region31: #{tpu_custom_call.1} parent=27 // pred_region
          %s182 = sand.u32 %s28, 1
          %s183 = scalar_lea.sflag [#allocation3], %s182
          %s184 = sand.u32 %s28, 1
          %s185 = smul.addr %s184, 16
          %s186 = scalar_lea.vmem [#allocation2], %s185
          %s188 = ssub.s32 256, 256
          %189 = vsyncadd %s183, %s188
          %s190 = smul.addr %s18, 2
          %s191 = smul.addr %s190, 128
          %s192 = scalar_lea.hbm %s0, %s191
          %s193 = sshll.u32 %s186, 4
          %s194 = int_to_ptr.vmem [resolvable:$true] %s193
          %199 = dma.hbm_to_vmem [thread:$0]  %s192, 256, %s194, %s183, 128, 128, 8
        $region32: #{tpu_custom_call.1} parent=27 // pred_fallthru
          _
      $region28: #{tpu_custom_call.1} parent=5 // pred_fallthru
        _
      %p200 = scmp.le.s32.totalorder 1, %s18
      %p201 = scmp.lt.s32.totalorder %s18, 5
      %p202 = pnand %p200, %p201
      %p203 = pneg %p202
      // Predicated region
      $region33: #{tpu_custom_call.1} parent=5 // pred_check
        _
      $region34: #{tpu_custom_call.1} parent=5 // pred_check_branch
        %205 = sbr.rel (%p202) target = $region36
      $region35: #{tpu_custom_call.1} parent=5 // pred_region
        %s206 = ssub.s32 %s18, 1
        %s207 = sand.u32 %s31, 1
        %s208 = scalar_lea.sflag [#allocation3], %s207
        %s209 = sand.u32 %s31, 1
        %s210 = smul.addr %s209, 16
        %s211 = scalar_lea.vmem [#allocation2], %s210
        // Predicated region
        $region37: #{tpu_custom_call.1} parent=35 // pred_check
          %p212 = pneg %p44
        $region38: #{tpu_custom_call.1} parent=35 // pred_check_branch
          %214 = sbr.rel (%p212) target = $region40
        $region39: #{tpu_custom_call.1} parent=35 // pred_region
          %215 = dma.done %s208, 256
        $region40: #{tpu_custom_call.1} parent=35 // pred_fallthru
          _
        // Predicated region
        $region41: #{tpu_custom_call.1} parent=35 // pred_check
          %p216 = pneg %p65
        $region42: #{tpu_custom_call.1} parent=35 // pred_check_branch
          %218 = sbr.rel (%p216) target = $region44
        $region43: #{tpu_custom_call.1} parent=35 // pred_region
          %219 = dma.done [#allocation7], 512
        $region44: #{tpu_custom_call.1} parent=35 // pred_fallthru
          _
        // Predicated region
        $region45: #{tpu_custom_call.1} parent=35 // pred_check
          %p220 = pneg %p107
        $region46: #{tpu_custom_call.1} parent=35 // pred_check_branch
          %222 = sbr.rel (%p220) target = $region48
        $region47: #{tpu_custom_call.1} parent=35 // pred_region
          %223 = dma.done [#allocation5], 16
        $region48: #{tpu_custom_call.1} parent=35 // pred_fallthru
          _
        %224 = sfence
        %s225 = sand.u32 %s31, 1
        %s226 = scalar_lea.sflag [#allocation3], %s225
        %s227 = sand.u32 %s31, 1
        %s228 = smul.addr %s227, 16
        %s229 = scalar_lea.vmem [#allocation2], %s228
        %p230 = pneg %p44
        %p231 = pneg %p41
        %p232 = pneg %p65
        %p233 = pneg %p62
        %p234 = pneg %p86
        %p235 = pneg %p83
        %p236 = pneg %p107
        %p237 = pneg %p104
        %p238 = pneg %p133
        %p239 = pneg %p130
        %s240 = sand.u32 %s120, 1
        %s241 = scalar_lea.sflag [#allocation4], %s240
        %s242 = sand.u32 %s120, 1
        %s243 = smul.addr %s242, 16
        %s244 = scalar_lea.vmem [#allocation9], %s243
        %v246 = vld [vmem:[%s211] sm:$0xff]
        %v247 = vld [vmem:[%s211 + $0x8] sm:$0xff]
        %v248 = vlaneseq
        %v249 = vshrl.u32 %v248, 7
        %v250 = vadd.s32 %v249, 8
        %v251 = vlaneseq
        %v252 = vand.u32 %v251, 127
        %vm253 = vcmp.eq.s32.totalorder %v249, %v252
        %vm254 = vcmp.eq.s32.totalorder %v250, %v252
        %v255 = vsel %vm253, 1, 0
        %v256 = vsel %vm254, 1, 0
        %v257 = vcvt.s32.f32 %v255
        %v258 = vcvt.s32.f32 %v256
        %vm259 = vcmask 523264
        %v261 = vsel %vm259, %v246, 0
        %v264 = vsel %vm259, %v247, 0
        %266 = vmatprep.subr.mxu0 0.0
        %267 = vmatpush1.xpose.msra.mxu0 %v261
        %268 = vmatprep.subr.mxu0 0.0
        %269 = vmatpush1.xpose.msra.mxu0 %v264
        %270 = vmatprep.subr.mxu0 0.0
        %271 = vmatpush1.xpose.msra.mxu0 0.0
        %272 = vmatprep.subr.mxu0 0.0
        %273 = vmatpush1.xpose.msra.mxu0 0.0
        %274 = vmatprep.subr.mxu0 0.0
        %275 = vmatpush1.xpose.msra.mxu0 0.0
        %276 = vmatprep.subr.mxu0 0.0
        %277 = vmatpush1.xpose.msra.mxu0 0.0
        %278 = vmatprep.subr.mxu0 0.0
        %279 = vmatpush1.xpose.msra.mxu0 0.0
        %280 = vmatprep.subr.mxu0 0.0
        %281 = vmatpush1.xpose.msra.mxu0 0.0
        %282 = vmatprep.subr.mxu0 0.0
        %283 = vmatpush1.xpose.msra.mxu0 0.0
        %284 = vmatprep.subr.mxu0 0.0
        %285 = vmatpush1.xpose.msra.mxu0 0.0
        %286 = vmatprep.subr.mxu0 0.0
        %287 = vmatpush1.xpose.msra.mxu0 0.0
        %288 = vmatprep.subr.mxu0 0.0
        %289 = vmatpush1.xpose.msra.mxu0 0.0
        %290 = vmatprep.subr.mxu0 0.0
        %291 = vmatpush1.xpose.msra.mxu0 0.0
        %292 = vmatprep.subr.mxu0 0.0
        %293 = vmatpush1.xpose.msra.mxu0 0.0
        %294 = vmatprep.subr.mxu0 0.0
        %295 = vmatpush1.xpose.msra.mxu0 0.0
        %296 = vmatprep.subr.mxu0 0.0
        %297 = vmatpush1.xpose.msra.mxu0 0.0
        %298 = vmatprep.subr.mxu0 0.0
        %299 = vmatpush1.xpose.msra.mxu0 0.0
        %300 = vmatprep.subr.mxu0 0.0
        %301 = vmatpush1.xpose.msra.mxu0 0.0
        %302 = vmatprep.subr.mxu0 0.0
        %303 = vmatpush1.xpose.msra.mxu0 0.0
        %304 = vmatprep.subr.mxu0 0.0
        %305 = vmatpush1.xpose.msra.mxu0 0.0
        %306 = vmatprep.subr.mxu0 0.0
        %307 = vmatpush1.xpose.msra.mxu0 0.0
        %308 = vmatprep.subr.mxu0 0.0
        %309 = vmatpush1.xpose.msra.mxu0 0.0
        %310 = vmatprep.subr.mxu0 0.0
        %311 = vmatpush1.xpose.msra.mxu0 0.0
        %312 = vmatprep.subr.mxu0 0.0
        %313 = vmatpush1.xpose.msra.mxu0 0.0
        %314 = vmatprep.subr.mxu0 0.0
        %315 = vmatpush1.xpose.msra.mxu0 0.0
        %316 = vmatprep.subr.mxu0 0.0
        %317 = vmatpush1.xpose.msra.mxu0 0.0
        %318 = vmatprep.subr.mxu0 0.0
        %319 = vmatpush1.xpose.msra.mxu0 0.0
        %320 = vmatprep.subr.mxu0 0.0
        %321 = vmatpush1.xpose.msra.mxu0 0.0
        %322 = vmatprep.subr.mxu0 0.0
        %323 = vmatpush1.xpose.msra.mxu0 0.0
        %324 = vmatprep.subr.mxu0 0.0
        %325 = vmatpush1.xpose.msra.mxu0 0.0
        %326 = vmatprep.subr.mxu0 0.0
        %327 = vmatpush1.xpose.msra.mxu0 0.0
        %328 = vmatprep.subr.mxu0 0.0
        %329 = vmatpush1.xpose.msra.mxu0 0.0
        %330 = vmatprep.mubr.f32.mxu0 0.0
        %331 = vmatmul.mubr.f32.gmra.mrb[0].mxu0 %v261
        %v332 = vpop.f32.mrb[0].mxu0
        %v333 = vadd.f32 0.0, %v332
        %v334 = vpop.f32.mrb[0].mxu0
        %335 = vmatprep.mubr.f32.mxu0 0.0
        %336 = vmatmul.mubr.f32.gmra.mrb[0].mxu0 %v264
        %v337 = vpop.f32.mrb[0].mxu0
        %v338 = vadd.f32 0.0, %v337
        %v339 = vpop.f32.mrb[0].mxu0
        %340 = vdwg.mxu0
        %v341 = vmul.f32 %v257, %v333
        %v342 = vmul.f32 %v258, %v338
        %vm343 = vcmask 130048
        %v344 = vsel %vm343, %v341, 0.0
        %345 = vadd.xlane.f32.xlu0 %v344
        %v346 = vpop.xlane.xlu0 %345
        %v347 = vsel %vm343, %v342, 0.0
        %348 = vadd.xlane.f32.xlu0 %v347
        %v349 = vpop.xlane.xlu0 %348
        %v350 = vadd.f32 %v344, %v347
        %v351 = vrot.slane %v350, 4
        %v352 = vadd.f32 %v350, %v351
        %v353 = vrot.slane %v352, 2
        %v354 = vadd.f32 %v352, %v353
        %v355 = vrot.slane %v354, 1
        %v356 = vadd.f32 %v354, %v355
        %v357 = vadd.f32 %v346, %v356
        %v358 = vadd.f32 %v349, %v356
        %v359 = vmul.f32 %v333, 2.0
        %v360 = vmul.f32 %v338, 2.0
        %v361 = vsub.f32 %v357, %v359
        %v362 = vsub.f32 %v358, %v360
        %v363 = vmax.f32 %v361, 0.0
        %v364 = vmax.f32 %v362, 0.0
        %v365 = vmul.f32 %v363, -0.11111111
        %v366 = vmul.f32 %v364, -0.11111111
        %v367 = vmul.f32 %v365, 1.442695
        %v368 = vpow.pop %v367
        %v369 = vmul.f32 %v366, 1.442695
        %v370 = vpow.pop %v369
        %v371 = vsel %vm343, %v368, -inf
        %372 = vmax.xlane.f32.xlu0 %v371
        %v373 = vpop.xlane.xlu0 %372
        %v374 = vsel %vm343, %v370, -inf
        %375 = vmax.xlane.f32.xlu0 %v374
        %v376 = vpop.xlane.xlu0 %375
        %vm377 = vcmp.ge.f32.partialorder %v368, %v373
        %vm378 = vcmp.ge.f32.partialorder %v370, %v376
        %v379 = vsel %vm377, 1, 0
        %v380 = vsel %vm378, 1, 0
        %v381 = vcvt.s32.f32 %v379
        %v382 = vcvt.s32.f32 %v380
        %v383 = vsel %vm343, %v381, 0.0
        %384 = vadd.xlane.f32.xlu0 %v383
        %v385 = vpop.xlane.xlu0 %384
        %v386 = vsel %vm343, %v382, 0.0
        %387 = vadd.xlane.f32.xlu0 %v386
        %v388 = vpop.xlane.xlu0 %387
        %v389 = vsel %vm377, -1.0, %v368
        %v390 = vsel %vm378, -1.0, %v370
        %v391 = vsel %vm343, %v389, -inf
        %392 = vmax.xlane.f32.xlu0 %v391
        %v393 = vpop.xlane.xlu0 %392
        %v394 = vsel %vm343, %v390, -inf
        %395 = vmax.xlane.f32.xlu0 %v394
        %v396 = vpop.xlane.xlu0 %395
        %vm397 = vcmp.ge.f32.partialorder %v389, %v393
        %vm398 = vcmp.ge.f32.partialorder %v390, %v396
        %v399 = vsel %vm397, 1, 0
        %v400 = vsel %vm398, 1, 0
        %v401 = vcvt.s32.f32 %v399
        %v402 = vcvt.s32.f32 %v400
        %v403 = vsel %vm343, %v401, 0.0
        %404 = vadd.xlane.f32.xlu0 %v403
        %v405 = vpop.xlane.xlu0 %404
        %v406 = vsel %vm343, %v402, 0.0
        %407 = vadd.xlane.f32.xlu0 %v406
        %v408 = vpop.xlane.xlu0 %407
        %v409 = vadd.f32 %v385, %v405
        %v410 = vadd.f32 %v388, %v408
        %v411 = vsel %vm397, -1.0, %v389
        %v412 = vsel %vm398, -1.0, %v390
        %v413 = vsel %vm343, %v411, -inf
        %414 = vmax.xlane.f32.xlu0 %v413
        %v415 = vpop.xlane.xlu0 %414
        %v416 = vsel %vm343, %v412, -inf
        %417 = vmax.xlane.f32.xlu0 %v416
        %v418 = vpop.xlane.xlu0 %417
        %vm419 = vcmp.ge.f32.partialorder %v385, 3.0
        %vm420 = vcmp.ge.f32.partialorder %v388, 3.0
        %vm421 = vcmp.ge.f32.partialorder %v409, 3.0
        %vm422 = vcmp.ge.f32.partialorder %v410, 3.0
        %v423 = vsel %vm421, %v393, %v415
        %v424 = vsel %vm422, %v396, %v418
        %v425 = vsel %vm419, %v373, %v423
        %v426 = vsel %vm420, %v376, %v424
        %vm427 = vcmp.ge.f32.partialorder %v368, %v425
        %vm428 = vcmp.ge.f32.partialorder %v370, %v426
        %v429 = vsel %vm427, 1, 0
        %v430 = vsel %vm428, 1, 0
        %v431 = vcvt.s32.f32 %v429
        %v432 = vcvt.s32.f32 %v430
        %v433 = vsub.f32 1.0, %v257
        %v434 = vsub.f32 1.0, %v258
        %v435 = vmul.f32 %v431, %v433
        %v436 = vmul.f32 %v432, %v434
        %v437 = vmul.f32 %v435, %v368
        %v438 = vmul.f32 %v436, %v370
        %v439 = vadd.f32 %v257, %v437
        %v440 = vadd.f32 %v258, %v438
        %v441 = vsel %vm343, %v439, 0.0
        %442 = vadd.xlane.f32.xlu0 %v441
        %v443 = vpop.xlane.xlu0 %442
        %v444 = vsel %vm343, %v440, 0.0
        %445 = vadd.xlane.f32.xlu0 %v444
        %v446 = vpop.xlane.xlu0 %445
        %v447 = vadd.f32 %v443, 1.0
        %v448 = vadd.f32 %v446, 1.0
        %v449 = vrsqrt.pop %v447
        %v450 = vrsqrt.pop %v448
        %v451 = vmul.f32 %v257, %v449
        %v452 = vmul.f32 %v258, %v450
        %v453 = vsel %vm343, %v451, 0.0
        %v454 = vsel %vm343, %v452, 0.0
        %v455 = vadd.f32 %v453, %v454
        %v456 = vrot.slane %v455, 4
        %v457 = vadd.f32 %v455, %v456
        %v458 = vrot.slane %v457, 2
        %v459 = vadd.f32 %v457, %v458
        %v460 = vrot.slane %v459, 1
        %v461 = vadd.f32 %v459, %v460
        %v462 = vmul.f32 %v439, %v449
        %v463 = vmul.f32 %v440, %v450
        %v464 = vmul.f32 %v462, %v461
        %v465 = vmul.f32 %v463, %v461
        %v467 = vsel %vm343, %v464, 0
        %v470 = vsel %vm343, %v465, 0
        %472 = vmatprep.subr.mxu0 0.0
        %473 = vmatpush1.msra.mxu0 %v464
        %474 = vmatprep.subr.mxu0 0.0
        %475 = vmatpush1.msra.mxu0 %v465
        %476 = vmatprep.subr.mxu0 0.0
        %477 = vmatpush1.msra.mxu0 0.0
        %478 = vmatprep.subr.mxu0 0.0
        %479 = vmatpush1.msra.mxu0 0.0
        %480 = vmatprep.subr.mxu0 0.0
        %481 = vmatpush1.msra.mxu0 0.0
        %482 = vmatprep.subr.mxu0 0.0
        %483 = vmatpush1.msra.mxu0 0.0
        %484 = vmatprep.subr.mxu0 0.0
        %485 = vmatpush1.msra.mxu0 0.0
        %486 = vmatprep.subr.mxu0 0.0
        %487 = vmatpush1.msra.mxu0 0.0
        %488 = vmatprep.subr.mxu0 0.0
        %489 = vmatpush1.msra.mxu0 0.0
        %490 = vmatprep.subr.mxu0 0.0
        %491 = vmatpush1.msra.mxu0 0.0
        %492 = vmatprep.subr.mxu0 0.0
        %493 = vmatpush1.msra.mxu0 0.0
        %494 = vmatprep.subr.mxu0 0.0
        %495 = vmatpush1.msra.mxu0 0.0
        %496 = vmatprep.subr.mxu0 0.0
        %497 = vmatpush1.msra.mxu0 0.0
        %498 = vmatprep.subr.mxu0 0.0
        %499 = vmatpush1.msra.mxu0 0.0
        %500 = vmatprep.subr.mxu0 0.0
        %501 = vmatpush1.msra.mxu0 0.0
        %502 = vmatprep.subr.mxu0 0.0
        %503 = vmatpush1.msra.mxu0 0.0
        %504 = vmatprep.subr.mxu0 0.0
        %505 = vmatpush1.msra.mxu0 0.0
        %506 = vmatprep.subr.mxu0 0.0
        %507 = vmatpush1.msra.mxu0 0.0
        %508 = vmatprep.subr.mxu0 0.0
        %509 = vmatpush1.msra.mxu0 0.0
        %510 = vmatprep.subr.mxu0 0.0
        %511 = vmatpush1.msra.mxu0 0.0
        %512 = vmatprep.subr.mxu0 0.0
        %513 = vmatpush1.msra.mxu0 0.0
        %514 = vmatprep.subr.mxu0 0.0
        %515 = vmatpush1.msra.mxu0 0.0
        %516 = vmatprep.subr.mxu0 0.0
        %517 = vmatpush1.msra.mxu0 0.0
        %518 = vmatprep.subr.mxu0 0.0
        %519 = vmatpush1.msra.mxu0 0.0
        %520 = vmatprep.subr.mxu0 0.0
        %521 = vmatpush1.msra.mxu0 0.0
        %522 = vmatprep.subr.mxu0 0.0
        %523 = vmatpush1.msra.mxu0 0.0
        %524 = vmatprep.subr.mxu0 0.0
        %525 = vmatpush1.msra.mxu0 0.0
        %526 = vmatprep.subr.mxu0 0.0
        %527 = vmatpush1.msra.mxu0 0.0
        %528 = vmatprep.subr.mxu0 0.0
        %529 = vmatpush1.msra.mxu0 0.0
        %530 = vmatprep.subr.mxu0 0.0
        %531 = vmatpush1.msra.mxu0 0.0
        %532 = vmatprep.subr.mxu0 0.0
        %533 = vmatpush1.msra.mxu0 0.0
        %534 = vmatprep.subr.mxu0 0.0
        %535 = vmatpush1.msra.mxu0 0.0
        %536 = vmatprep.mubr.f32.mxu0 0.0
        %537 = vmatmul.mubr.f32.gmra.mrb[0].mxu0 %v467
        %v538 = vpop.f32.mrb[0].mxu0
        %v539 = vadd.f32 0.0, %v538
        %v540 = vpop.f32.mrb[0].mxu0
        %541 = vmatprep.mubr.f32.mxu0 0.0
        %542 = vmatmul.mubr.f32.gmra.mrb[0].mxu0 %v470
        %v543 = vpop.f32.mrb[0].mxu0
        %v544 = vadd.f32 0.0, %v543
        %v545 = vpop.f32.mrb[0].mxu0
        %546 = vdwg.mxu0
        %s547 = sld [smem:[#allocation8]]
        %s548 = sld [smem:[#allocation8 + $0x1]]
        %s549 = sld [smem:[#allocation8 + $0x2]]
        %v550 = vstv %s547
        %v551 = vmul.f32 %v550, %v257
        %v552 = vmul.f32 %v550, %v258
        %v553 = vstv %s548
        %v554 = vmul.f32 %v553, %v464
        %v555 = vmul.f32 %v553, %v465
        %v556 = vadd.f32 %v551, %v554
        %v557 = vadd.f32 %v552, %v555
        %v558 = vstv %s549
        %v559 = vmul.f32 %v558, %v539
        %v560 = vmul.f32 %v558, %v544
        %v561 = vadd.f32 %v556, %v559
        %v562 = vadd.f32 %v557, %v560
        %v563 = vpack.c.bf16 %v247, %v246
        %v564 = vld [vmem:[#allocation6] sm:$0xf]
        %v565 = vld [vmem:[#allocation6 + $0x4] sm:$0xf]
        %v566 = vld [vmem:[#allocation6 + $0x8] sm:$0xf]
        %v567 = vld [vmem:[#allocation6 + $0xc] sm:$0xf]
        %v568 = vld [vmem:[#allocation6 + $0x10] sm:$0xf]
        %v569 = vld [vmem:[#allocation6 + $0x14] sm:$0xf]
        %v570 = vld [vmem:[#allocation6 + $0x18] sm:$0xf]
        %v571 = vld [vmem:[#allocation6 + $0x1c] sm:$0xf]
        %v580 = vunpack.c.l.b16 %v564
        %v581 = vunpack.c.l.b16 %v565
        %v582 = vunpack.c.l.b16 %v566
        %v583 = vunpack.c.l.b16 %v567
        %v584 = vunpack.c.l.b16 %v568
        %v585 = vunpack.c.l.b16 %v569
        %v586 = vunpack.c.l.b16 %v570
        %v587 = vunpack.c.l.b16 %v571
        %v588 = vpack.c.b16 %v581, %v580
        %v589 = vpack.c.b16 %v583, %v582
        %v590 = vpack.c.b16 %v585, %v584
        %v591 = vpack.c.b16 %v587, %v586
        %v597 = vsel %vm259, %v563, 0
        %599 = vmatprep.subr.bf16.mxu0 0
        %600 = vmatpush1.bf16.msra.mxu0 %v588
        %601 = vmatprep.subr.bf16.mxu0 0
        %602 = vmatpush1.bf16.msra.mxu0 %v589
        %603 = vmatprep.subr.bf16.mxu0 0
        %604 = vmatpush1.bf16.msra.mxu0 %v590
        %605 = vmatprep.subr.bf16.mxu0 0
        %606 = vmatpush1.bf16.msra.mxu0 %v591
        %607 = vmatprep.subr.bf16.mxu0 0
        %608 = vmatpush1.bf16.msra.mxu0 0
        %609 = vmatprep.subr.bf16.mxu0 0
        %610 = vmatpush1.bf16.msra.mxu0 0
        %611 = vmatprep.subr.bf16.mxu0 0
        %612 = vmatpush1.bf16.msra.mxu0 0
        %613 = vmatprep.subr.bf16.mxu0 0
        %614 = vmatpush1.bf16.msra.mxu0 0
        %615 = vmatprep.subr.bf16.mxu0 0
        %616 = vmatpush1.bf16.msra.mxu0 0
        %617 = vmatprep.subr.bf16.mxu0 0
        %618 = vmatpush1.bf16.msra.mxu0 0
        %619 = vmatprep.subr.bf16.mxu0 0
        %620 = vmatpush1.bf16.msra.mxu0 0
        %621 = vmatprep.subr.bf16.mxu0 0
        %622 = vmatpush1.bf16.msra.mxu0 0
        %623 = vmatprep.subr.bf16.mxu0 0
        %624 = vmatpush1.bf16.msra.mxu0 0
        %625 = vmatprep.subr.bf16.mxu0 0
        %626 = vmatpush1.bf16.msra.mxu0 0
        %627 = vmatprep.subr.bf16.mxu0 0
        %628 = vmatpush1.bf16.msra.mxu0 0
        %629 = vmatprep.subr.bf16.mxu0 0
        %630 = vmatpush1.bf16.msra.mxu0 0
        %631 = vmatprep.mubr.bf16.mxu0 0
        %632 = vmatmul.mubr.bf16.gmra.mrb[0].mxu0 %v597
        %v633 = vpop.f32.mrb[0].mxu0
        %v634 = vadd.f32 0.0, %v633
        %v635 = vpop.f32.mrb[0].mxu0
        %v636 = vpop.f32.mrb[0].mxu0
        %v637 = vadd.f32 0.0, %v636
        %v638 = vpop.f32.mrb[0].mxu0
        %639 = vdwg.mxu0
        %v640 = vpack.c.bf16 %v562, %v561
        %v641 = vpack.c.bf16 %v637, %v634
        %v642 = vld [vmem:[%s2] sm:$0x1]
        %v644 = vlaneseq
        %v645 = vshrl.u32 %v644, 7
        %v646 = vsub.s32 0, %v645
        %v647 = vrot.slane %v642, %v646
        %v650 = vsel %vm343, %v640, 0
        %652 = vmatprep.subr.bf16.mxu0 0
        %653 = vmatpush1.bf16.msra.mxu0 %v641
        %654 = vmatprep.subr.bf16.mxu0 0
        %655 = vmatpush1.bf16.msra.mxu0 0
        %656 = vmatprep.subr.bf16.mxu0 0
        %657 = vmatpush1.bf16.msra.mxu0 0
        %658 = vmatprep.subr.bf16.mxu0 0
        %659 = vmatpush1.bf16.msra.mxu0 0
        %660 = vmatprep.subr.bf16.mxu0 0
        %661 = vmatpush1.bf16.msra.mxu0 0
        %662 = vmatprep.subr.bf16.mxu0 0
        %663 = vmatpush1.bf16.msra.mxu0 0
        %664 = vmatprep.subr.bf16.mxu0 0
        %665 = vmatpush1.bf16.msra.mxu0 0
        %666 = vmatprep.subr.bf16.mxu0 0
        %667 = vmatpush1.bf16.msra.mxu0 0
        %668 = vmatprep.subr.bf16.mxu0 0
        %669 = vmatpush1.bf16.msra.mxu0 0
        %670 = vmatprep.subr.bf16.mxu0 0
        %671 = vmatpush1.bf16.msra.mxu0 0
        %672 = vmatprep.subr.bf16.mxu0 0
        %673 = vmatpush1.bf16.msra.mxu0 0
        %674 = vmatprep.subr.bf16.mxu0 0
        %675 = vmatpush1.bf16.msra.mxu0 0
        %676 = vmatprep.subr.bf16.mxu0 0
        %677 = vmatpush1.bf16.msra.mxu0 0
        %678 = vmatprep.subr.bf16.mxu0 0
        %679 = vmatpush1.bf16.msra.mxu0 0
        %680 = vmatprep.subr.bf16.mxu0 0
        %681 = vmatpush1.bf16.msra.mxu0 0
        %682 = vmatprep.subr.bf16.mxu0 0
        %683 = vmatpush1.bf16.msra.mxu0 0
        %684 = vmatprep.mubr.bf16.mxu0 0
        %685 = vmatmul.mubr.bf16.gmra.mrb[0].mxu0 %v650
        %v686 = vpop.f32.mrb[0].mxu0
        %v687 = vadd.f32 %v647, %v686
        %v688 = vpop.f32.mrb[0].mxu0
        %v689 = vpop.f32.mrb[0].mxu0
        %v690 = vadd.f32 %v647, %v689
        %v691 = vpop.f32.mrb[0].mxu0
        %692 = vdwg.mxu0
        %v693 = vmax.f32 %v687, 0.0
        %v694 = vmax.f32 %v690, 0.0
        %695 = vst [vmem:[%s244] sm:$0xff] %v693
        %696 = vst [vmem:[%s244 + $0x8] sm:$0xff] %v694
        %s697 = sand.u32 %s120, 1
        %s698 = scalar_lea.sflag [#allocation4], %s697
        %s699 = sand.u32 %s120, 1
        %s700 = smul.addr %s699, 16
        %s701 = scalar_lea.vmem [#allocation9], %s700
        // Predicated region
        $region49: #{tpu_custom_call.1} parent=35 // pred_check
          %p702 = pneg %p130
        $region50: #{tpu_custom_call.1} parent=35 // pred_check_branch
          %704 = sbr.rel (%p702) target = $region52
        $region51: #{tpu_custom_call.1} parent=35 // pred_region
          %s706 = ssub.s32 256, 256
          %707 = vsyncadd %s698, %s706
          %s708 = smul.addr %s23, 2
          %s709 = smul.addr %s708, 128
          %s710 = scalar_lea.hbm %s4, %s709
          %s711 = sshll.u32 %s701, 4
          %s712 = int_to_ptr.vmem [resolvable:$true] %s711
          %717 = dma.vmem_to_hbm [thread:$0]  %s712, 256, %s710, %s698, 128, 128, 8
        $region52: #{tpu_custom_call.1} parent=35 // pred_fallthru
          _
      $region36: #{tpu_custom_call.1} parent=5 // pred_fallthru
        _
      %p718 = scmp.le.s32.totalorder 2, %s18
      // Predicated region
      $region53: #{tpu_custom_call.1} parent=5 // pred_check
        %p719 = pneg %p718
      $region54: #{tpu_custom_call.1} parent=5 // pred_check_branch
        %721 = sbr.rel (%p719) target = $region56
      $region55: #{tpu_custom_call.1} parent=5 // pred_region
        %s722 = ssub.s32 %s18, 2
        // Predicated region
        $region57: #{tpu_custom_call.1} parent=55 // pred_check
          %p723 = pneg %p136
        $region58: #{tpu_custom_call.1} parent=55 // pred_check_branch
          %725 = sbr.rel (%p723) target = $region60
        $region59: #{tpu_custom_call.1} parent=55 // pred_region
          %s726 = sand.u32 %s121, 1
          %s727 = scalar_lea.sflag [#allocation4], %s726
          %s728 = sand.u32 %s121, 1
          %s729 = smul.addr %s728, 16
          %s730 = scalar_lea.vmem [#allocation9], %s729
          %731 = dma.done %s727, 256
        $region60: #{tpu_custom_call.1} parent=55 // pred_fallthru
          _
      $region56: #{tpu_custom_call.1} parent=5 // pred_fallthru
        _
    $region6: #{tpu_custom_call.1} parent=1 // loop_footer
      %s22 = sadd.s32 1, %s18
    $region7: #{tpu_custom_call.1} parent=1 // loop_footer_branch
      %17 = sbr.rel target = $region3
    $region8: #{tpu_custom_call.1} parent=1 // loop_exit
      _
    %732 = vsyncpa [#allocation3], 1
    %s733 = scalar_lea.sflag [#allocation3], 1
    %734 = vsyncpa %s733, 1
    %735 = vsyncpa [#allocation7], 1
    %736 = vsyncpa [#allocation4], 1
    %s737 = scalar_lea.sflag [#allocation4], 1
    %738 = vsyncpa %s737, 1
    %739 = vsyncpa [#allocation5], 1
    %s740 = scalar_lea.sflag [#allocation5], 1
    %741 = vsyncpa %s740, 1

</llo_original>
